<compile_context>
chip_gen: v7x
topology: tpu7x:2x2x1
jax: 0.10.0
libtpu: 0.0.40
codegen_flags: <defaults>
</compile_context>

<pallas_src>
import jax
import jax.numpy as jnp
from jax.experimental import pallas as pl
from jax.experimental.pallas import tpu as pltpu


def _nominal_vf_kernel(x_ref, y_ref, dx_ref, dy_ref):
    x = x_ref[...]
    y = y_ref[...]
    in_r1 = x >= 2.0
    # Inner branch is only reached when x < 2, so no explicit (x < 2) test.
    dx_ref[...] = jnp.where(in_r1, -y, jnp.where(y >= 0.0, -1.0, 1.0))
    dy_ref[...] = jnp.where(in_r1, x + 2.0, -1.0)


def _cdiv(a, b):
    return -(-a // b)


def nominal_vector_field(t, z, *, lanes=512, max_block_rows=256):
    """Pallas equivalent of NominalVectorField.forward(t, z).

    t is unused (kept for ODE-solver signature compatibility).
    z is a tuple (x, y) of equal-shaped float arrays; returns (dx, dy).
    """
    del t  # the vector field is time-invariant
    x, y = z
    assert x.shape == y.shape and x.dtype == y.dtype

    orig_shape = x.shape
    n = x.size

    # Flatten and pad to a sublane-dense (rows % 8 == 0), lane-dense
    # (last dim = 512, a multiple of 128) slab.
    rows = _cdiv(n, lanes)
    rows = _cdiv(rows, 8) * 8
    if rows <= max_block_rows:
        tr = rows                      # single block row-tile (small inputs)
    else:
        tr = max_block_rows
        rows = _cdiv(rows, tr) * tr    # rows divisible by the block height

    padded = rows * lanes
    xf = x.reshape(-1)
    yf = y.reshape(-1)
    if padded != n:
        xf = jnp.pad(xf, (0, padded - n))
        yf = jnp.pad(yf, (0, padded - n))
    x2 = xf.reshape(rows, lanes)
    y2 = yf.reshape(rows, lanes)

    spec = pl.BlockSpec((tr, lanes), lambda i: (i, 0))
    dx2, dy2 = pl.pallas_call(
        _nominal_vf_kernel,
        out_shape=(
            jax.ShapeDtypeStruct((rows, lanes), x.dtype),
            jax.ShapeDtypeStruct((rows, lanes), x.dtype),
        ),
        grid=(rows // tr,),
        in_specs=[spec, spec],
        out_specs=(spec, spec),
        compiler_params=pltpu.CompilerParams(
            dimension_semantics=("parallel",)
        ),
    )(x2, y2)

    dx = dx2.reshape(-1)[:n].reshape(orig_shape)
    dy = dy2.reshape(-1)[:n].reshape(orig_shape)
    return dx, dy


def _reference(t, z):
    """Pure-JAX reference mirroring the PyTorch masked-assignment semantics."""
    del t
    x, y = z
    dx = jnp.zeros_like(x)
    dy = jnp.zeros_like(y)
    idx1 = x >= 2
    idx2 = (x < 2) & (y >= 0)
    idx3 = (x < 2) & (y < 0)
    dx = jnp.where(idx1, -y, dx)
    dy = jnp.where(idx1, x + 2, dy)
    dx = jnp.where(idx2, -1.0, dx)
    dy = jnp.where(idx2, -1.0, dy)
    dx = jnp.where(idx3, 1.0, dx)
    dy = jnp.where(idx3, -1.0, dy)
    return dx, dy


if __name__ == "__main__":
    key = jax.random.PRNGKey(0)
    t = jnp.float32(0.0)

    # Case 1: small batch of 2-D hybrid-system states, shape (batch=8, n=128).
    k1, k2, k3, k4 = jax.random.split(key, 4)
    x = jax.random.uniform(k1, (8, 128), jnp.float32, minval=-4.0, maxval=4.0)
    y = jax.random.uniform(k2, (8, 128), jnp.float32, minval=-4.0, maxval=4.0)
    dx, dy = nominal_vector_field(t, (x, y))
    jax.block_until_ready((dx, dy))
    rdx, rdy = _reference(t, (x, y))
    assert jnp.array_equal(dx, rdx), "dx mismatch vs reference (case 1)"
    assert jnp.array_equal(dy, rdy), "dy mismatch vs reference (case 1)"

    # Case 2: ragged size (exercises padding path), shape (4, 1000).
    x = jax.random.uniform(k3, (4, 1000), jnp.float32, minval=-4.0, maxval=4.0)
    y = jax.random.uniform(k4, (4, 1000), jnp.float32, minval=-4.0, maxval=4.0)
    dx, dy = nominal_vector_field(t, (x, y))
    jax.block_until_ready((dx, dy))
    rdx, rdy = _reference(t, (x, y))
    assert jnp.array_equal(dx, rdx), "dx mismatch vs reference (case 2)"
    assert jnp.array_equal(dy, rdy), "dy mismatch vs reference (case 2)"

    print("KERNEL_OK")
</pallas_src>

<mosaic_0001>
module attributes {stable_mosaic.version = 11 : i64} {
  func.func @_nominal_vf_kernel(%arg0: i32, %arg1: memref<8x512xf32, #tpu.memory_space<vmem>>, %arg2: memref<8x512xf32, #tpu.memory_space<vmem>>, %arg3: memref<8x512xf32, #tpu.memory_space<vmem>>, %arg4: memref<8x512xf32, #tpu.memory_space<vmem>>) attributes {dimension_semantics = [#tpu.dimension_semantics<parallel>], iteration_bounds = array<i64: 1>, scalar_prefetch = 0 : i64, scratch_operands = 0 : i64, tpu.core_type = #tpu.core_type<tc>, window_params = [{transform_indices = @transform_0, window_bounds = array<i64: 8, 512>}, {transform_indices = @transform_1, window_bounds = array<i64: 8, 512>}, {transform_indices = @transform_2, window_bounds = array<i64: 8, 512>}, {transform_indices = @transform_3, window_bounds = array<i64: 8, 512>}]} {
    %c0 = arith.constant 0 : index
    %c0_0 = arith.constant 0 : index
    %0 = vector.load %arg1[%c0, %c0_0] : memref<8x512xf32, #tpu.memory_space<vmem>>, vector<8x512xf32>
    %c0_1 = arith.constant 0 : index
    %c0_2 = arith.constant 0 : index
    %1 = vector.load %arg2[%c0_1, %c0_2] : memref<8x512xf32, #tpu.memory_space<vmem>>, vector<8x512xf32>
    %cst = arith.constant 2.000000e+00 : f32
    %2 = vector.broadcast %cst : f32 to vector<8x512xf32>
    %3 = arith.cmpf oge, %0, %2 : vector<8x512xf32>
    %cst_3 = arith.constant 0.000000e+00 : f32
    %4 = vector.broadcast %cst_3 : f32 to vector<8x512xf32>
    %5 = arith.subf %4, %1 : vector<8x512xf32>
    %cst_4 = arith.constant 0.000000e+00 : f32
    %6 = vector.broadcast %cst_4 : f32 to vector<8x512xf32>
    %7 = arith.cmpf oge, %1, %6 : vector<8x512xf32>
    %cst_5 = arith.constant -1.000000e+00 : f32
    %cst_6 = arith.constant 1.000000e+00 : f32
    %8 = vector.broadcast %cst_5 : f32 to vector<8x512xf32>
    %9 = vector.broadcast %cst_6 : f32 to vector<8x512xf32>
    %10 = arith.select %7, %8, %9 : vector<8x512xi1>, vector<8x512xf32>
    %11 = arith.select %3, %5, %10 : vector<8x512xi1>, vector<8x512xf32>
    %c0_7 = arith.constant 0 : index
    %c0_8 = arith.constant 0 : index
    %12 = vector.load %arg3[%c0_7, %c0_8] : memref<8x512xf32, #tpu.memory_space<vmem>>, vector<8x512xf32>
    tpu.vector_store %arg3[%c0_7, %c0_8], %11 {strides = array<i32>} : memref<8x512xf32, #tpu.memory_space<vmem>>, vector<8x512xf32>,
    %cst_9 = arith.constant 2.000000e+00 : f32
    %13 = vector.broadcast %cst_9 : f32 to vector<8x512xf32>
    %14 = arith.addf %0, %13 : vector<8x512xf32>
    %cst_10 = arith.constant -1.000000e+00 : f32
    %15 = vector.broadcast %cst_10 : f32 to vector<8x512xf32>
    %16 = arith.select %3, %14, %15 : vector<8x512xi1>, vector<8x512xf32>
    %c0_11 = arith.constant 0 : index
    %c0_12 = arith.constant 0 : index
    %17 = vector.load %arg4[%c0_11, %c0_12] : memref<8x512xf32, #tpu.memory_space<vmem>>, vector<8x512xf32>
    tpu.vector_store %arg4[%c0_11, %c0_12], %16 {strides = array<i32>} : memref<8x512xf32, #tpu.memory_space<vmem>>, vector<8x512xf32>,
    return
  }
  func.func @transform_0(%arg0: i32) -> (i32, i32) {
    %c0_i32 = arith.constant 0 : i32
    %c0_i32_0 = arith.constant 0 : i32
    return %arg0, %c0_i32 : i32, i32
  }
  func.func @transform_1(%arg0: i32) -> (i32, i32) {
    %c0_i32 = arith.constant 0 : i32
    %c0_i32_0 = arith.constant 0 : i32
    return %arg0, %c0_i32 : i32, i32
  }
  func.func @transform_2(%arg0: i32) -> (i32, i32) {
    %c0_i32 = arith.constant 0 : i32
    %c0_i32_0 = arith.constant 0 : i32
    return %arg0, %c0_i32 : i32, i32
  }
  func.func @transform_3(%arg0: i32) -> (i32, i32) {
    %c0_i32 = arith.constant 0 : i32
    %c0_i32_0 = arith.constant 0 : i32
    return %arg0, %c0_i32 : i32, i32
  }
}

</mosaic_0001>

<llo_original>
// kernel: tpu_custom_call.1
$region0: #{tpu_custom_call.1}
  #allocation0 [shape = 'u32[]', space=smem, size = 0x4, offset = 0x4, fixed_abs, tag = 'smem constant byte address 0x4 - core index']
  #allocation1 [shape = 'u32[144,128]{1,0:T(1,128)}', space=vmem, size = 0x12000, scoped, tag = 'internal scratch']
  %s0 = inlined_call_operand.hbm [shape: f32[8,512], index: 0, kind: input, shape index: {}]
  %s1 = inlined_call_operand.hbm [shape: f32[8,512], index: 1, kind: input, shape index: {}]
  %s2 = inlined_call_operand.hbm [shape: f32[8,512], index: 2, kind: output, shape index: {0}]
  %s3 = inlined_call_operand.hbm [shape: f32[8,512], index: 3, kind: output, shape index: {1}]
  %4 = xla_tuple %s2, %s3
  %s5 = sld [smem:[#allocation0]]
  $region34: #{tpu_custom_call.1} parent=0
    _
  %s7 = ssub.s32 1, %s5
  %s8 = scalar_select 0, %s7, %s5
  $region1: #{tpu_custom_call.1} parent=0
    #allocation2 [shape = 'u8[16384]{0}', space=vmem, size = 0x4000, scoped, tag = 'input window, operand 0, single buffered']
    #allocation3 [shape = 's32[1]{0}', space=sflag, size = 0x4, scoped, tag = 'scoped memory for tpu_custom_call.1']
    #allocation4 [shape = 's32[1]{0}', space=sflag, size = 0x4, scoped, tag = 'scoped memory for tpu_custom_call.1']
    #allocation5 [shape = 'u8[16384]{0}', space=vmem, size = 0x4000, scoped, tag = 'input window, operand 1, single buffered']
    #allocation6 [shape = 's32[1]{0}', space=sflag, size = 0x4, scoped, tag = 'scoped memory for tpu_custom_call.1']
    #allocation7 [shape = 'u8[16384]{0}', space=vmem, size = 0x4000, scoped, tag = 'output window, operand 0, single buffered']
    #allocation8 [shape = 'u8[16384]{0}', space=vmem, size = 0x4000, scoped, tag = 'output window, operand 1, single buffered']
    #allocation9 [shape = 's32[1]{0}', space=sflag, size = 0x4, scoped, tag = 'scoped memory for tpu_custom_call.1']
    %9 = vsyncpa [#allocation3], 0
    %10 = vsyncpa [#allocation6], 0
    %11 = vsyncpa [#allocation4], 0
    %12 = vsyncpa [#allocation9], 0
    // Predicated region
    $region2: #{tpu_custom_call.1} parent=1 // pred_check
      _
    $region3: #{tpu_custom_call.1} parent=1 // pred_check_branch
      %14 = sbr.rel (0) target = $region5
    $region4: #{tpu_custom_call.1} parent=1 // pred_region
      %s16 = ssub.s32 512, 512
      %17 = vsyncadd [#allocation3], %s16
      %s19 = sshll.u32 [#allocation2], 4
      %s20 = int_to_ptr.vmem [resolvable:$true] %s19
      %22 = dma.hbm_to_vmem [thread:$0]  %s0, 512, %s20, [#allocation3]
    $region5: #{tpu_custom_call.1} parent=1 // pred_fallthru
      _
    // Predicated region
    $region6: #{tpu_custom_call.1} parent=1 // pred_check
      _
    $region7: #{tpu_custom_call.1} parent=1 // pred_check_branch
      %24 = sbr.rel (0) target = $region9
    $region8: #{tpu_custom_call.1} parent=1 // pred_region
      %s26 = ssub.s32 512, 512
      %27 = vsyncadd [#allocation6], %s26
      %s29 = sshll.u32 [#allocation5], 4
      %s30 = int_to_ptr.vmem [resolvable:$true] %s29
      %32 = dma.hbm_to_vmem [thread:$0]  %s1, 512, %s30, [#allocation6]
    $region9: #{tpu_custom_call.1} parent=1 // pred_fallthru
      _
    // Predicated region
    $region10: #{tpu_custom_call.1} parent=1 // pred_check
      _
    $region11: #{tpu_custom_call.1} parent=1 // pred_check_branch
      %34 = sbr.rel (0) target = $region13
    $region12: #{tpu_custom_call.1} parent=1 // pred_region
      %35 = dma.done [#allocation3], 512
    $region13: #{tpu_custom_call.1} parent=1 // pred_fallthru
      _
    // Predicated region
    $region14: #{tpu_custom_call.1} parent=1 // pred_check
      _
    $region15: #{tpu_custom_call.1} parent=1 // pred_check_branch
      %37 = sbr.rel (0) target = $region17
    $region16: #{tpu_custom_call.1} parent=1 // pred_region
      %38 = dma.done [#allocation6], 512
    $region17: #{tpu_custom_call.1} parent=1 // pred_fallthru
      _
    %v39 = vld [vmem:[#allocation2] sm:$0xff]
    %v40 = vld [vmem:[#allocation2 + $0x8] sm:$0xff]
    %v41 = vld [vmem:[#allocation2 + $0x10] sm:$0xff]
    %v42 = vld [vmem:[#allocation2 + $0x18] sm:$0xff]
    %v43 = vld [vmem:[#allocation5] sm:$0xff]
    %v44 = vld [vmem:[#allocation5 + $0x8] sm:$0xff]
    %v45 = vld [vmem:[#allocation5 + $0x10] sm:$0xff]
    %v46 = vld [vmem:[#allocation5 + $0x18] sm:$0xff]
    %vm47 = vcmp.ge.f32.partialorder %v39, 2.0
    %vm48 = vcmp.ge.f32.partialorder %v40, 2.0
    %vm49 = vcmp.ge.f32.partialorder %v41, 2.0
    %vm50 = vcmp.ge.f32.partialorder %v42, 2.0
    %v51 = vsub.f32 0.0, %v43
    %v52 = vsub.f32 0.0, %v44
    %v53 = vsub.f32 0.0, %v45
    %v54 = vsub.f32 0.0, %v46
    %vm55 = vcmp.ge.f32.partialorder %v43, 0.0
    %vm56 = vcmp.ge.f32.partialorder %v44, 0.0
    %vm57 = vcmp.ge.f32.partialorder %v45, 0.0
    %vm58 = vcmp.ge.f32.partialorder %v46, 0.0
    %v59 = vsel %vm55, -1.0, 1.0
    %v60 = vsel %vm56, -1.0, 1.0
    %v61 = vsel %vm57, -1.0, 1.0
    %v62 = vsel %vm58, -1.0, 1.0
    %v63 = vsel %vm47, %v51, %v59
    %v64 = vsel %vm48, %v52, %v60
    %v65 = vsel %vm49, %v53, %v61
    %v66 = vsel %vm50, %v54, %v62
    %67 = vst [vmem:[#allocation7] sm:$0xff] %v63
    %68 = vst [vmem:[#allocation7 + $0x8] sm:$0xff] %v64
    %69 = vst [vmem:[#allocation7 + $0x10] sm:$0xff] %v65
    %70 = vst [vmem:[#allocation7 + $0x18] sm:$0xff] %v66
    %v71 = vadd.f32 %v39, 2.0
    %v72 = vadd.f32 %v40, 2.0
    %v73 = vadd.f32 %v41, 2.0
    %v74 = vadd.f32 %v42, 2.0
    %v75 = vsel %vm47, %v71, -1.0
    %v76 = vsel %vm48, %v72, -1.0
    %v77 = vsel %vm49, %v73, -1.0
    %v78 = vsel %vm50, %v74, -1.0
    %79 = vst [vmem:[#allocation8] sm:$0xff] %v75
    %80 = vst [vmem:[#allocation8 + $0x8] sm:$0xff] %v76
    %81 = vst [vmem:[#allocation8 + $0x10] sm:$0xff] %v77
    %82 = vst [vmem:[#allocation8 + $0x18] sm:$0xff] %v78
    // Predicated region
    $region18: #{tpu_custom_call.1} parent=1 // pred_check
      _
    $region19: #{tpu_custom_call.1} parent=1 // pred_check_branch
      %84 = sbr.rel (0) target = $region21
    $region20: #{tpu_custom_call.1} parent=1 // pred_region
      %s86 = ssub.s32 512, 512
      %87 = vsyncadd [#allocation4], %s86
      %s89 = sshll.u32 [#allocation7], 4
      %s90 = int_to_ptr.vmem [resolvable:$true] %s89
      %92 = dma.vmem_to_hbm [thread:$0]  %s90, 512, %s2, [#allocation4]
    $region21: #{tpu_custom_call.1} parent=1 // pred_fallthru
      _
    // Predicated region
    $region22: #{tpu_custom_call.1} parent=1 // pred_check
      _
    $region23: #{tpu_custom_call.1} parent=1 // pred_check_branch
      %94 = sbr.rel (0) target = $region25
    $region24: #{tpu_custom_call.1} parent=1 // pred_region
      %s96 = ssub.s32 512, 512
      %97 = vsyncadd [#allocation9], %s96
      %s99 = sshll.u32 [#allocation8], 4
      %s100 = int_to_ptr.vmem [resolvable:$true] %s99
      %102 = dma.vmem_to_hbm [thread:$0]  %s100, 512, %s3, [#allocation9]
    $region25: #{tpu_custom_call.1} parent=1 // pred_fallthru
      _
    // Predicated region
    $region26: #{tpu_custom_call.1} parent=1 // pred_check
      _
    $region27: #{tpu_custom_call.1} parent=1 // pred_check_branch
      %104 = sbr.rel (0) target = $region29
    $region28: #{tpu_custom_call.1} parent=1 // pred_region
      %105 = dma.done [#allocation4], 512
    $region29: #{tpu_custom_call.1} parent=1 // pred_fallthru
      _
    // Predicated region
    $region30: #{tpu_custom_call.1} parent=1 // pred_check
      _
    $region31: #{tpu_custom_call.1} parent=1 // pred_check_branch
      %107 = sbr.rel (0) target = $region33
    $region32: #{tpu_custom_call.1} parent=1 // pred_region
      %108 = dma.done [#allocation9], 512
    $region33: #{tpu_custom_call.1} parent=1 // pred_fallthru
      _
    %109 = vsyncpa [#allocation3], 1
    %110 = vsyncpa [#allocation6], 1
    %111 = vsyncpa [#allocation4], 1
    %112 = vsyncpa [#allocation9], 1

</llo_original>
